<compile_context>
chip_gen: v7x
topology: tpu7x:2x2x1
jax: 0.10.0
libtpu: 0.0.40
codegen_flags: <defaults>
</compile_context>

<pallas_src>
import functools
import math

import jax
import jax.numpy as jnp
from jax import lax
from jax.experimental import pallas as pl
from jax.experimental.pallas import tpu as pltpu


def _round_up(x, m):
    return (x + m - 1) // m * m


# ---------------------------------------------------------------------------
# Pass 1: Conv1d (single im2col matmul) + exact GELU + partial BN statistics.
# ---------------------------------------------------------------------------
def _conv_gelu_stats_kernel(x_ref, w_ref, b_ref, y_ref, stats_ref, *,
                            BB, B, T_out, C, K, stride, padding, Hp,
                            needs_mask):
    xv = x_ref[...].astype(jnp.float32)                      # (BB, T, C)

    # Temporal halo handled in VMEM (no host-side jnp.pad HBM copy).
    if padding > 0:
        zpad = jnp.zeros((BB, padding, C), jnp.float32)
        xv = jnp.concatenate([zpad, xv, zpad], axis=1)       # (BB, T+2p, C)

    # im2col: fuse the K tap matmuls into a single matmul of contraction K*C.
    span = (T_out - 1) * stride + 1
    cols = [xv[:, r:r + span:stride, :] for r in range(K)]   # K x (BB, T_out, C)
    xin = jnp.concatenate(cols, axis=-1).reshape(BB * T_out, K * C)

    y = jnp.dot(xin, w_ref[...], preferred_element_type=jnp.float32)
    y = y + b_ref[...]                                       # (1, Hp) broadcast

    # Exact GELU (PyTorch nn.GELU() default): 0.5*x*(1+erf(x/sqrt(2)))
    y = 0.5 * y * (1.0 + lax.erf(y * 0.7071067811865476))

    y_store = y.astype(y_ref.dtype)
    y_ref[...] = y_store.reshape(BB, T_out, Hp)

    # Per-tile partial BN statistics computed from the *stored* values so the
    # pass-2 normalization is self-consistent with what it reads back.
    ys = y_store.astype(jnp.float32)
    if needs_mask:  # only when the last batch tile is partial
        rows = lax.broadcasted_iota(jnp.int32, (BB * T_out, 1), 0)
        gb = pl.program_id(0) * BB + rows // T_out
        ys = jnp.where(gb < B, ys, 0.0)
    s1 = jnp.sum(ys, axis=0, keepdims=True)                  # (1, Hp)
    s2 = jnp.sum(ys * ys, axis=0, keepdims=True)             # (1, Hp)
    stats_ref[...] = jnp.concatenate([s1, s2], axis=0).reshape(1, 2, Hp)


# ---------------------------------------------------------------------------
# Pass 2: apply folded BatchNorm affine (one fused multiply-add per element),
#         writing the final H-wide output directly (no extra slice copy).
# ---------------------------------------------------------------------------
def _bn_apply_kernel(y_ref, ss_ref, o_ref, *, BB, T_out, Hp, H):
    y = y_ref[...].astype(jnp.float32).reshape(BB * T_out, Hp)
    scale = ss_ref[0:1, :]
    shift = ss_ref[1:2, :]
    o = y * scale + shift
    o = o.reshape(BB, T_out, Hp)
    if H != Hp:
        o = o[..., :H]
    o_ref[...] = o.astype(o_ref.dtype)


def conv1d_gelu_bn(x, weight, bias, gamma, beta, stride, padding, eps=1e-5,
                   vmem_budget_bytes=4 << 20):
    """x: (B, T, C) channels-last. weight: (H, C, K) PyTorch Conv1d layout.

    Returns (B, T_out, H) matching Conv1d -> GELU -> BatchNorm1d (train mode).
    """
    B, T, C = x.shape
    H, Cw, K = weight.shape
    assert Cw == C, "weight in-channels must match input feature dim"
    T_out = (T + 2 * padding - K) // stride + 1
    Hp = _round_up(H, 128)  # lane-dense hidden dim inside the kernels

    # (H, C, K) -> (K*C, Hp) im2col layout, zero-padded on the H axis.
    w2 = jnp.transpose(weight, (2, 1, 0)).reshape(K * C, H)
    w2 = jnp.pad(w2, ((0, 0), (0, Hp - H))).astype(x.dtype)
    b2 = jnp.pad(bias.reshape(1, H).astype(jnp.float32), ((0, 0), (0, Hp - H)))

    # Batch tile sized from a conservative per-step VMEM budget; explicit
    # vmem_limit covers the lower scoped default on v5e.
    per_b = 4 * (T * C + T_out * K * C + 2 * T_out * Hp)
    BB = int(max(1, min(B, vmem_budget_bytes // max(per_b, 1))))
    G = pl.cdiv(B, BB)
    needs_mask = (B % BB) != 0
    cparams = pltpu.CompilerParams(dimension_semantics=("parallel",),
                                   vmem_limit_bytes=32 << 20)

    pass1 = functools.partial(
        _conv_gelu_stats_kernel, BB=BB, B=B, T_out=T_out, C=C, K=K,
        stride=stride, padding=padding, Hp=Hp, needs_mask=needs_mask)

    y, part = pl.pallas_call(
        pass1,
        out_shape=(jax.ShapeDtypeStruct((B, T_out, Hp), x.dtype),
                   jax.ShapeDtypeStruct((G, 2, Hp), jnp.float32)),
        grid=(G,),
        in_specs=[
            pl.BlockSpec((BB, T, C), lambda i: (i, 0, 0)),
            pl.BlockSpec((K * C, Hp), lambda i: (0, 0)),
            pl.BlockSpec((1, Hp), lambda i: (0, 0)),
        ],
        out_specs=(pl.BlockSpec((BB, T_out, Hp), lambda i: (i, 0, 0)),
                   pl.BlockSpec((1, 2, Hp), lambda i: (i, 0, 0))),
        compiler_params=cparams,
    )(x, w2, b2)

    # Tiny per-channel (Hp-wide) math done once in XLA: fold BN mean/var and
    # gamma/beta into a single (scale, shift) pair.
    stats = jnp.sum(part, axis=0)                            # (2, Hp)
    n = jnp.float32(B * T_out)
    mean = stats[0] / n
    var = jnp.maximum(stats[1] / n - mean * mean, 0.0)       # biased (train mode)
    g2 = jnp.pad(gamma.astype(jnp.float32), (0, Hp - H))
    be2 = jnp.pad(beta.astype(jnp.float32), (0, Hp - H))
    scale = g2 * lax.rsqrt(var + eps)
    shift = be2 - mean * scale
    ss = jnp.stack([scale, shift], axis=0)                   # (2, Hp)

    pass2 = functools.partial(_bn_apply_kernel, BB=BB, T_out=T_out, Hp=Hp, H=H)
    out = pl.pallas_call(
        pass2,
        out_shape=jax.ShapeDtypeStruct((B, T_out, H), x.dtype),
        grid=(G,),
        in_specs=[pl.BlockSpec((BB, T_out, Hp), lambda i: (i, 0, 0)),
                  pl.BlockSpec((2, Hp), lambda i: (0, 0))],
        out_specs=pl.BlockSpec((BB, T_out, H), lambda i: (i, 0, 0)),
        compiler_params=cparams,
    )(y, ss)

    return out


class VideoInitializerPallas:
    """Pallas/JAX port of VideoInitializer: stacked Conv1d -> GELU -> BatchNorm1d."""

    def __init__(self, input_dim, hidden_dim, kernel_size, stride, padding, key):
        self.kernel_size = [int(k) for k in kernel_size]
        self.stride = [int(s) for s in stride]
        self.padding = [int(p) for p in padding]
        self.layers = []
        keys = jax.random.split(key, 2 * len(self.kernel_size))
        for li, k in enumerate(self.kernel_size):
            in_dim = input_dim if li == 0 else hidden_dim
            # PyTorch Conv1d default init: U(-1/sqrt(in_ch*k), 1/sqrt(in_ch*k))
            bound = 1.0 / math.sqrt(in_dim * k)
            w = jax.random.uniform(keys[2 * li], (hidden_dim, in_dim, k),
                                   jnp.float32, minval=-bound, maxval=bound)
            b = jax.random.uniform(keys[2 * li + 1], (hidden_dim,),
                                   jnp.float32, minval=-bound, maxval=bound)
            gamma = jnp.ones((hidden_dim,), jnp.float32)   # BN affine defaults
            beta = jnp.zeros((hidden_dim,), jnp.float32)
            self.layers.append((w, b, gamma, beta))

    def __call__(self, visual_feat):
        # visual_feat: (B, T, input_dim); equivalent to the PyTorch
        # transpose -> Sequential -> transpose pipeline.
        x = visual_feat
        for (w, b, g, be), k, s, p in zip(self.layers, self.kernel_size,
                                          self.stride, self.padding):
            x = conv1d_gelu_bn(x, w, b, g, be, s, p)
        # TODO(synk): BatchNorm1d running_mean/running_var buffers are not
        # tracked; only the training-mode (batch-statistic) forward is computed.
        return x


if __name__ == "__main__":
    key = jax.random.PRNGKey(0)
    k_param, k_data = jax.random.split(key)

    B, T = 2, 8
    input_dim = 8
    hidden_dim = 32
    kernel_size, stride, padding = [3], [1], [1]

    model = VideoInitializerPallas(input_dim, hidden_dim, kernel_size, stride,
                                   padding, k_param)
    visual_feat = jax.random.normal(k_data, (B, T, input_dim), dtype=jnp.float32)

    out = model(visual_feat)
    jax.block_until_ready(out)

    T_out = (T + 2 * padding[0] - kernel_size[0]) // stride[0] + 1
    assert out.shape == (B, T_out, hidden_dim), out.shape
    assert bool(jnp.all(jnp.isfinite(out)))
    print("KERNEL_OK")
</pallas_src>

<mosaic_0001>
module attributes {stable_mosaic.version = 11 : i64} {
  func.func @_conv_gelu_stats_kernel(%arg0: i32, %arg1: memref<2x8x8xf32, #tpu.memory_space<vmem>>, %arg2: memref<24x128xf32, #tpu.memory_space<vmem>>, %arg3: memref<1x128xf32, #tpu.memory_space<vmem>>, %arg4: memref<2x8x128xf32, #tpu.memory_space<vmem>>, %arg5: memref<1x2x128xf32, #tpu.memory_space<vmem>>) attributes {dimension_semantics = [#tpu.dimension_semantics<parallel>], iteration_bounds = array<i64: 1>, scalar_prefetch = 0 : i64, scratch_operands = 0 : i64, tpu.core_type = #tpu.core_type<tc>, window_params = [{transform_indices = @transform_0, window_bounds = array<i64: 2, 8, 8>}, {pipeline_mode = #tpu.pipeline_mode<synchronous>, transform_indices = @transform_1, window_bounds = array<i64: 24, 128>}, {pipeline_mode = #tpu.pipeline_mode<synchronous>, transform_indices = @transform_2, window_bounds = array<i64: 1, 128>}, {transform_indices = @transform_3, window_bounds = array<i64: 2, 8, 128>}, {transform_indices = @transform_4, window_bounds = array<i64: 1, 2, 128>}]} {
    %c0 = arith.constant 0 : index
    %c0_0 = arith.constant 0 : index
    %c0_1 = arith.constant 0 : index
    %0 = vector.load %arg1[%c0, %c0_0, %c0_1] : memref<2x8x8xf32, #tpu.memory_space<vmem>>, vector<2x8x8xf32>
    %cst = arith.constant 0.000000e+00 : f32
    %1 = vector.broadcast %cst : f32 to vector<2x1x8xf32>
    %2 = tpu.concatenate %1, %0, %1 in 1 : vector<2x1x8xf32>, vector<2x8x8xf32>, vector<2x1x8xf32> -> vector<2x10x8xf32>
    %3 = vector.extract_strided_slice %2 {offsets = [0, 0, 0], sizes = [2, 8, 8], strides = [1, 1, 1]} : vector<2x10x8xf32> to vector<2x8x8xf32>
    %4 = vector.extract_strided_slice %2 {offsets = [0, 1, 0], sizes = [2, 8, 8], strides = [1, 1, 1]} : vector<2x10x8xf32> to vector<2x8x8xf32>
    %5 = vector.extract_strided_slice %2 {offsets = [0, 2, 0], sizes = [2, 8, 8], strides = [1, 1, 1]} : vector<2x10x8xf32> to vector<2x8x8xf32>
    %6 = tpu.concatenate %3, %4, %5 in 2 : vector<2x8x8xf32>, vector<2x8x8xf32>, vector<2x8x8xf32> -> vector<2x8x24xf32>
    %7 = vector.shape_cast %6 : vector<2x8x24xf32> to vector<16x24xf32>
    %c0_2 = arith.constant 0 : index
    %c0_3 = arith.constant 0 : index
    %8 = vector.load %arg2[%c0_2, %c0_3] : memref<24x128xf32, #tpu.memory_space<vmem>>, vector<24x128xf32>
    %cst_4 = arith.constant dense<0.000000e+00> : vector<16x128xf32>
    %9 = tpu.matmul %7, %8, %cst_4 {dimension_numbers = #tpu.dot_dimension_numbers<[1], [0], [0], [1], [0, 0, 1, 1], [], []>} : vector<16x24xf32>, vector<24x128xf32>, vector<16x128xf32> -> vector<16x128xf32>
    %c0_5 = arith.constant 0 : index
    %c0_6 = arith.constant 0 : index
    %10 = vector.load %arg3[%c0_5, %c0_6] : memref<1x128xf32, #tpu.memory_space<vmem>>, vector<1x128xf32>
    %11 = vector.broadcast %10 : vector<1x128xf32> to vector<16x128xf32>
    %12 = arith.addf %9, %11 : vector<16x128xf32>
    %cst_7 = arith.constant 5.000000e-01 : f32
    %13 = vector.broadcast %cst_7 : f32 to vector<16x128xf32>
    %14 = arith.mulf %13, %12 : vector<16x128xf32>
    %cst_8 = arith.constant 0.707106769 : f32
    %15 = vector.broadcast %cst_8 : f32 to vector<16x128xf32>
    %16 = arith.mulf %12, %15 : vector<16x128xf32>
    %17 = math.erf %16 : vector<16x128xf32>
    %cst_9 = arith.constant 1.000000e+00 : f32
    %18 = vector.broadcast %cst_9 : f32 to vector<16x128xf32>
    %19 = arith.addf %18, %17 : vector<16x128xf32>
    %20 = arith.mulf %14, %19 : vector<16x128xf32>
    %21 = vector.shape_cast %20 : vector<16x128xf32> to vector<2x8x128xf32>
    %c0_10 = arith.constant 0 : index
    %c0_11 = arith.constant 0 : index
    %c0_12 = arith.constant 0 : index
    %22 = vector.load %arg4[%c0_10, %c0_11, %c0_12] : memref<2x8x128xf32, #tpu.memory_space<vmem>>, vector<2x8x128xf32>
    tpu.vector_store %arg4[%c0_10, %c0_11, %c0_12], %21 {strides = array<i32>} : memref<2x8x128xf32, #tpu.memory_space<vmem>>, vector<2x8x128xf32>,
    %cst_13 = arith.constant dense<0.000000e+00> : vector<128xf32>
    %23 = vector.multi_reduction <add>, %20, %cst_13 [0] : vector<16x128xf32> to vector<128xf32>
    %24 = vector.shape_cast %23 : vector<128xf32> to vector<1x128xf32>
    %25 = arith.mulf %20, %20 : vector<16x128xf32>
    %cst_14 = arith.constant dense<0.000000e+00> : vector<128xf32>
    %26 = vector.multi_reduction <add>, %25, %cst_14 [0] : vector<16x128xf32> to vector<128xf32>
    %27 = vector.shape_cast %26 : vector<128xf32> to vector<1x128xf32>
    %28 = tpu.concatenate %24, %27 in 0 : vector<1x128xf32>, vector<1x128xf32> -> vector<2x128xf32>
    %29 = vector.shape_cast %28 : vector<2x128xf32> to vector<1x2x128xf32>
    %c0_15 = arith.constant 0 : index
    %c0_16 = arith.constant 0 : index
    %c0_17 = arith.constant 0 : index
    %30 = vector.load %arg5[%c0_15, %c0_16, %c0_17] : memref<1x2x128xf32, #tpu.memory_space<vmem>>, vector<1x2x128xf32>
    tpu.vector_store %arg5[%c0_15, %c0_16, %c0_17], %29 {strides = array<i32>} : memref<1x2x128xf32, #tpu.memory_space<vmem>>, vector<1x2x128xf32>,
    return
  }
  func.func @transform_0(%arg0: i32) -> (i32, i32, i32) {
    %c0_i32 = arith.constant 0 : i32
    %c0_i32_0 = arith.constant 0 : i32
    %c0_i32_1 = arith.constant 0 : i32
    return %arg0, %c0_i32, %c0_i32_0 : i32, i32, i32
  }
  func.func @transform_1(%arg0: i32) -> (i32, i32) {
    %c0_i32 = arith.constant 0 : i32
    %c0_i32_0 = arith.constant 0 : i32
    %c0_i32_1 = arith.constant 0 : i32
    return %c0_i32, %c0_i32_0 : i32, i32
  }
  func.func @transform_2(%arg0: i32) -> (i32, i32) {
    %c0_i32 = arith.constant 0 : i32
    %c0_i32_0 = arith.constant 0 : i32
    %c0_i32_1 = arith.constant 0 : i32
    return %c0_i32, %c0_i32_0 : i32, i32
  }
  func.func @transform_3(%arg0: i32) -> (i32, i32, i32) {
    %c0_i32 = arith.constant 0 : i32
    %c0_i32_0 = arith.constant 0 : i32
    %c0_i32_1 = arith.constant 0 : i32
    return %arg0, %c0_i32, %c0_i32_0 : i32, i32, i32
  }
  func.func @transform_4(%arg0: i32) -> (i32, i32, i32) {
    %c0_i32 = arith.constant 0 : i32
    %c0_i32_0 = arith.constant 0 : i32
    %c0_i32_1 = arith.constant 0 : i32
    return %arg0, %c0_i32, %c0_i32_0 : i32, i32, i32
  }
}

</mosaic_0001>

<llo_original>
// kernel: tpu_custom_call.1
$region0: #{tpu_custom_call.1}
  #allocation0 [shape = 'u32[]', space=smem, size = 0x4, offset = 0x4, fixed_abs, tag = 'smem constant byte address 0x4 - core index']
  #allocation1 [shape = 'u32[144,128]{1,0:T(1,128)}', space=vmem, size = 0x12000, scoped, tag = 'internal scratch']
  %s0 = inlined_call_operand.hbm [shape: f32[2,8,8], index: 0, kind: input, shape index: {}]
  %s1 = inlined_call_operand.hbm [shape: f32[24,128], index: 1, kind: input, shape index: {}]
  %s2 = inlined_call_operand.vmem [shape: f32[1,128], index: 2, kind: input, shape index: {}]
  %s3 = inlined_call_operand.hbm [shape: f32[2,8,128], index: 3, kind: output, shape index: {0}]
  %s4 = inlined_call_operand.hbm [shape: f32[1,2,128], index: 4, kind: output, shape index: {1}]
  %5 = xla_tuple %s3, %s4
  %s6 = sld [smem:[#allocation0]]
  $region38: #{tpu_custom_call.1} parent=0
    _
  %s8 = ssub.s32 1, %s6
  %s9 = scalar_select 0, %s8, %s6
  $region1: #{tpu_custom_call.1} parent=0
    #allocation2 [shape = 'u8[8192]{0}', space=vmem, size = 0x2000, scoped, tag = 'input window, operand 0, single buffered']
    #allocation3 [shape = 's32[1]{0}', space=sflag, size = 0x4, scoped, tag = 'scoped memory for tpu_custom_call.1']
    #allocation4 [shape = 's32[1]{0}', space=sflag, size = 0x4, scoped, tag = 'scoped memory for tpu_custom_call.1']
    #allocation5 [shape = 'u8[12288]{0}', space=vmem, size = 0x3000, scoped, tag = 'input window, operand 1, single buffered']
    #allocation6 [shape = 's32[1]{0}', space=sflag, size = 0x4, scoped, tag = 'scoped memory for tpu_custom_call.1']
    #allocation7 [shape = 'u8[8192]{0}', space=vmem, size = 0x2000, scoped, tag = 'output window, operand 0, single buffered']
    #allocation8 [shape = 'u8[1024]{0}', space=vmem, size = 0x400, scoped, tag = 'output window, operand 1, single buffered']
    #allocation9 [shape = 's32[1]{0}', space=sflag, size = 0x4, scoped, tag = 'scoped memory for tpu_custom_call.1']
    %10 = vsyncpa [#allocation3], 0
    %11 = vsyncpa [#allocation6], 0
    %12 = vsyncpa [#allocation4], 0
    %13 = vsyncpa [#allocation9], 0
    // Predicated region
    $region2: #{tpu_custom_call.1} parent=1 // pred_check
      _
    $region3: #{tpu_custom_call.1} parent=1 // pred_check_branch
      %15 = sbr.rel (0) target = $region5
    $region4: #{tpu_custom_call.1} parent=1 // pred_region
      %s17 = ssub.s32 256, 256
      %18 = vsyncadd [#allocation3], %s17
      %s19 = sshll.u32 [#allocation2], 4
      %s20 = int_to_ptr.vmem [resolvable:$true] %s19
      %25 = dma.hbm_to_vmem [thread:$0]  %s0, 256, %s20, [#allocation3], 128, 128, 8
    $region5: #{tpu_custom_call.1} parent=1 // pred_fallthru
      _
    // Predicated region
    $region6: #{tpu_custom_call.1} parent=1 // pred_check
      _
    $region7: #{tpu_custom_call.1} parent=1 // pred_check_branch
      %27 = sbr.rel (0) target = $region9
    $region8: #{tpu_custom_call.1} parent=1 // pred_region
      %s29 = ssub.s32 384, 384
      %30 = vsyncadd [#allocation6], %s29
      %s31 = sshll.u32 [#allocation5], 4
      %s32 = int_to_ptr.vmem [resolvable:$true] %s31
      %37 = dma.hbm_to_vmem [thread:$0]  %s1, 384, %s32, [#allocation6], 128, 128, 8
    $region9: #{tpu_custom_call.1} parent=1 // pred_fallthru
      _
    // Predicated region
    $region10: #{tpu_custom_call.1} parent=1 // pred_check
      _
    $region11: #{tpu_custom_call.1} parent=1 // pred_check_branch
      %39 = sbr.rel (0) target = $region13
    $region12: #{tpu_custom_call.1} parent=1 // pred_region
      _
    $region13: #{tpu_custom_call.1} parent=1 // pred_fallthru
      _
    // Predicated region
    $region14: #{tpu_custom_call.1} parent=1 // pred_check
      _
    $region15: #{tpu_custom_call.1} parent=1 // pred_check_branch
      %41 = sbr.rel (0) target = $region17
    $region16: #{tpu_custom_call.1} parent=1 // pred_region
      %42 = dma.done [#allocation3], 256
    $region17: #{tpu_custom_call.1} parent=1 // pred_fallthru
      _
    // Predicated region
    $region18: #{tpu_custom_call.1} parent=1 // pred_check
      _
    $region19: #{tpu_custom_call.1} parent=1 // pred_check_branch
      %44 = sbr.rel (0) target = $region21
    $region20: #{tpu_custom_call.1} parent=1 // pred_region
      %45 = dma.done [#allocation6], 384
    $region21: #{tpu_custom_call.1} parent=1 // pred_fallthru
      _
    %v46 = vld [vmem:[#allocation2] sm:$0xff]
    %v47 = vld [vmem:[#allocation2 + $0x8] sm:$0xff]
    %v50 = vrot.slane %v46, 7
    %v51 = vrot.slane %v47, 7
    %vm54 = vcmask 1040384
    %v55 = vsel %vm54, 0.0, %v50
    %v56 = vsel %vm54, 0.0, %v51
    %v57 = vsel %vm54, %v50, 0.0
    %v58 = vsel %vm54, %v51, 0.0
    %vm63 = vcmask 1046528
    %v64 = vrot.slane %v55, 1
    %v65 = vrot.slane %v57, 1
    %v66 = vsel %vm63, %v64, %v65
    %v67 = vrot.slane %v56, 1
    %v68 = vrot.slane %v58, 1
    %v69 = vsel %vm63, %v67, %v68
    %70 = vrot.lane.b32.xlu0 %v66, 8
    %v71 = vpop.permute.xlu0 %70
    %72 = vrot.lane.b32.xlu0 %v69, 8
    %v73 = vpop.permute.xlu0 %72
    %vm76 = vcmask 1045504
    %v77 = vrot.slane %v55, 2
    %v78 = vrot.slane %v57, 2
    %v79 = vsel %vm76, %v77, %v78
    %v80 = vrot.slane %v56, 2
    %v81 = vrot.slane %v58, 2
    %v82 = vsel %vm76, %v80, %v81
    %83 = vrot.lane.b32.xlu0 %v79, 16
    %v84 = vpop.permute.xlu0 %83
    %85 = vrot.lane.b32.xlu0 %v82, 16
    %v86 = vpop.permute.xlu0 %85
    %vm89 = vcmask 64512
    %v90 = vsel %vm89, %v55, %v71
    %v91 = vsel %vm89, %v56, %v73
    %vm92 = vcmask 130048
    %v93 = vsel %vm92, %v90, %v84
    %v94 = vsel %vm92, %v91, %v86
    %v95 = vld [vmem:[#allocation5] sm:$0xff]
    %v96 = vld [vmem:[#allocation5 + $0x8] sm:$0xff]
    %v97 = vld [vmem:[#allocation5 + $0x10] sm:$0xff]
    %v98 = vld [vmem:[%s2] sm:$0x1]
    %v100 = vlaneseq
    %v101 = vshrl.u32 %v100, 7
    %v102 = vsub.s32 0, %v101
    %v103 = vrot.slane %v98, %v102
    %vm105 = vcmask 195584
    %v107 = vsel %vm105, %v93, 0
    %v110 = vsel %vm105, %v94, 0
    %112 = vmatprep.subr.mxu0 0.0
    %113 = vmatpush1.msra.mxu0 %v95
    %114 = vmatprep.subr.mxu0 0.0
    %115 = vmatpush1.msra.mxu0 %v96
    %116 = vmatprep.subr.mxu0 0.0
    %117 = vmatpush1.msra.mxu0 %v97
    %118 = vmatprep.subr.mxu0 0.0
    %119 = vmatpush1.msra.mxu0 0.0
    %120 = vmatprep.subr.mxu0 0.0
    %121 = vmatpush1.msra.mxu0 0.0
    %122 = vmatprep.subr.mxu0 0.0
    %123 = vmatpush1.msra.mxu0 0.0
    %124 = vmatprep.subr.mxu0 0.0
    %125 = vmatpush1.msra.mxu0 0.0
    %126 = vmatprep.subr.mxu0 0.0
    %127 = vmatpush1.msra.mxu0 0.0
    %128 = vmatprep.subr.mxu0 0.0
    %129 = vmatpush1.msra.mxu0 0.0
    %130 = vmatprep.subr.mxu0 0.0
    %131 = vmatpush1.msra.mxu0 0.0
    %132 = vmatprep.subr.mxu0 0.0
    %133 = vmatpush1.msra.mxu0 0.0
    %134 = vmatprep.subr.mxu0 0.0
    %135 = vmatpush1.msra.mxu0 0.0
    %136 = vmatprep.subr.mxu0 0.0
    %137 = vmatpush1.msra.mxu0 0.0
    %138 = vmatprep.subr.mxu0 0.0
    %139 = vmatpush1.msra.mxu0 0.0
    %140 = vmatprep.subr.mxu0 0.0
    %141 = vmatpush1.msra.mxu0 0.0
    %142 = vmatprep.subr.mxu0 0.0
    %143 = vmatpush1.msra.mxu0 0.0
    %144 = vmatprep.subr.mxu0 0.0
    %145 = vmatpush1.msra.mxu0 0.0
    %146 = vmatprep.subr.mxu0 0.0
    %147 = vmatpush1.msra.mxu0 0.0
    %148 = vmatprep.subr.mxu0 0.0
    %149 = vmatpush1.msra.mxu0 0.0
    %150 = vmatprep.subr.mxu0 0.0
    %151 = vmatpush1.msra.mxu0 0.0
    %152 = vmatprep.subr.mxu0 0.0
    %153 = vmatpush1.msra.mxu0 0.0
    %154 = vmatprep.subr.mxu0 0.0
    %155 = vmatpush1.msra.mxu0 0.0
    %156 = vmatprep.subr.mxu0 0.0
    %157 = vmatpush1.msra.mxu0 0.0
    %158 = vmatprep.subr.mxu0 0.0
    %159 = vmatpush1.msra.mxu0 0.0
    %160 = vmatprep.subr.mxu0 0.0
    %161 = vmatpush1.msra.mxu0 0.0
    %162 = vmatprep.subr.mxu0 0.0
    %163 = vmatpush1.msra.mxu0 0.0
    %164 = vmatprep.subr.mxu0 0.0
    %165 = vmatpush1.msra.mxu0 0.0
    %166 = vmatprep.subr.mxu0 0.0
    %167 = vmatpush1.msra.mxu0 0.0
    %168 = vmatprep.subr.mxu0 0.0
    %169 = vmatpush1.msra.mxu0 0.0
    %170 = vmatprep.subr.mxu0 0.0
    %171 = vmatpush1.msra.mxu0 0.0
    %172 = vmatprep.subr.mxu0 0.0
    %173 = vmatpush1.msra.mxu0 0.0
    %174 = vmatprep.subr.mxu0 0.0
    %175 = vmatpush1.msra.mxu0 0.0
    %176 = vmatprep.mubr.f32.mxu0 0.0
    %177 = vmatmul.mubr.f32.gmra.mrb[0].mxu0 %v107
    %v178 = vpop.f32.mrb[0].mxu0
    %v179 = vadd.f32 %v103, %v178
    %v180 = vpop.f32.mrb[0].mxu0
    %181 = vmatprep.mubr.f32.mxu0 0.0
    %182 = vmatmul.mubr.f32.gmra.mrb[0].mxu0 %v110
    %v183 = vpop.f32.mrb[0].mxu0
    %v184 = vadd.f32 %v103, %v183
    %v185 = vpop.f32.mrb[0].mxu0
    %186 = vdwg.mxu0
    %v187 = vmul.f32 %v179, 0.5
    %v188 = vmul.f32 %v184, 0.5
    %v189 = vmul.f32 %v179, 0.70710677
    %v190 = vmul.f32 %v184, 0.70710677
    %v191 = verf.f32.pop %v189
    %v192 = verf.f32.pop %v190
    %v193 = vadd.f32 %v191, 1.0
    %v194 = vadd.f32 %v192, 1.0
    %v195 = vmul.f32 %v187, %v193
    %v196 = vmul.f32 %v188, %v194
    %197 = vst [vmem:[#allocation7] sm:$0xff] %v195
    %198 = vst [vmem:[#allocation7 + $0x8] sm:$0xff] %v196
    %v199 = vadd.f32 %v195, %v196
    %v200 = vrot.slane %v199, 4
    %v201 = vadd.f32 %v199, %v200
    %v202 = vrot.slane %v201, 2
    %v203 = vadd.f32 %v201, %v202
    %v204 = vrot.slane %v203, 1
    %v205 = vadd.f32 %v203, %v204
    %v206 = vmul.f32 %v195, %v195
    %v207 = vmul.f32 %v196, %v196
    %v208 = vadd.f32 %v206, %v207
    %v209 = vrot.slane %v208, 4
    %v210 = vadd.f32 %v208, %v209
    %v211 = vrot.slane %v210, 2
    %v212 = vadd.f32 %v210, %v211
    %v213 = vrot.slane %v212, 1
    %v214 = vadd.f32 %v212, %v213
    %v215 = vsel %vm54, %v205, %v214
    %216 = vst [vmem:[#allocation8] sm:$0x3] %v215
    // Predicated region
    $region22: #{tpu_custom_call.1} parent=1 // pred_check
      _
    $region23: #{tpu_custom_call.1} parent=1 // pred_check_branch
      %218 = sbr.rel (0) target = $region25
    $region24: #{tpu_custom_call.1} parent=1 // pred_region
      %s220 = ssub.s32 256, 256
      %221 = vsyncadd [#allocation4], %s220
      %s222 = sshll.u32 [#allocation7], 4
      %s223 = int_to_ptr.vmem [resolvable:$true] %s222
      %228 = dma.vmem_to_hbm [thread:$0]  %s223, 256, %s3, [#allocation4], 128, 128, 8
    $region25: #{tpu_custom_call.1} parent=1 // pred_fallthru
      _
    // Predicated region
    $region26: #{tpu_custom_call.1} parent=1 // pred_check
      _
    $region27: #{tpu_custom_call.1} parent=1 // pred_check_branch
      %230 = sbr.rel (0) target = $region29
    $region28: #{tpu_custom_call.1} parent=1 // pred_region
      %s232 = ssub.s32 32, 32
      %233 = vsyncadd [#allocation9], %s232
      %s235 = sshll.u32 [#allocation8], 4
      %s236 = int_to_ptr.vmem [resolvable:$true] %s235
      %238 = dma.vmem_to_hbm [thread:$0]  %s236, 32, %s4, [#allocation9]
    $region29: #{tpu_custom_call.1} parent=1 // pred_fallthru
      _
    // Predicated region
    $region30: #{tpu_custom_call.1} parent=1 // pred_check
      _
    $region31: #{tpu_custom_call.1} parent=1 // pred_check_branch
      %240 = sbr.rel (0) target = $region33
    $region32: #{tpu_custom_call.1} parent=1 // pred_region
      %241 = dma.done [#allocation4], 256
    $region33: #{tpu_custom_call.1} parent=1 // pred_fallthru
      _
    // Predicated region
    $region34: #{tpu_custom_call.1} parent=1 // pred_check
      _
    $region35: #{tpu_custom_call.1} parent=1 // pred_check_branch
      %243 = sbr.rel (0) target = $region37
    $region36: #{tpu_custom_call.1} parent=1 // pred_region
      %244 = dma.done [#allocation9], 32
    $region37: #{tpu_custom_call.1} parent=1 // pred_fallthru
      _
    %245 = vsyncpa [#allocation3], 1
    %246 = vsyncpa [#allocation6], 1
    %247 = vsyncpa [#allocation4], 1
    %248 = vsyncpa [#allocation9], 1

</llo_original>
